<compile_context>
chip_gen: v7x
topology: tpu7x:2x2x1
jax: 0.10.0
libtpu: 0.0.40
codegen_flags: <defaults>
</compile_context>

<pallas_src>
import jax
import jax.numpy as jnp
from jax.experimental import pallas as pl
from jax.experimental.pallas import tpu as pltpu

EPS = 1e-5


# ----------------------- Fused PreNorm(Linear) kernel -----------------------
def _prenorm_linear_kernel(x_ref, gamma_ref, beta_ref, w_ref, b_ref, o_ref):
    # x_ref: (TM, D) row tile; gamma/beta: (1, D); w: (D, H); b: (1, H).
    x = x_ref[...].astype(jnp.float32)
    d = x.shape[-1]

    # Single-pass LayerNorm statistics over the feature axis (two XLU
    # reductions issued directly from x; rsqrt on the EUP).
    inv_d = 1.0 / d
    sx = jnp.sum(x, axis=-1, keepdims=True)
    sxx = jnp.sum(x * x, axis=-1, keepdims=True)
    mean = sx * inv_d
    var = jnp.maximum(sxx * inv_d - mean * mean, 0.0)
    inv = jax.lax.rsqrt(var + EPS)
    normed = (x - mean) * inv * gamma_ref[...].astype(jnp.float32) \
        + beta_ref[...].astype(jnp.float32)

    # fn = Linear(D -> H), fused. Operands in the weight's native dtype
    # (bf16 weight -> bf16 MXU operands), f32 accumulation.
    y = jnp.dot(normed.astype(w_ref.dtype), w_ref[...],
                preferred_element_type=jnp.float32)
    o_ref[...] = (y + b_ref[...].astype(jnp.float32)).astype(o_ref.dtype)


def prenorm_linear_pallas(x, gamma, beta, w, b, *, tm=256, out_dtype=None):
    """Fused PreNorm(Linear): Linear(LayerNorm(x)).

    x: (B, N, D); gamma/beta: (D,); w: (D, H); b: (H,). Returns (B, N, H).
    """
    B, N, D = x.shape
    H = w.shape[1]
    R = B * N
    out_dtype = out_dtype if out_dtype is not None else x.dtype

    x2d = x.reshape(R, D)
    gamma2 = gamma.reshape(1, D)
    beta2 = beta.reshape(1, D)
    b2 = b.reshape(1, H)

    # Clamp the row tile to the (8-aligned) problem size. No jnp.pad: the grid
    # is cdiv(R, tm) and Pallas masks the ragged tail block. Tail rows are
    # row-independent (LN + row-wise matmul), so any undefined tail data never
    # contaminates valid rows and is never stored.
    tm = max(8, min(tm, ((R + 7) // 8) * 8))
    num_tiles = pl.cdiv(R, tm)

    # VMEM budget from the actual dtypes: double-buffered x / output tiles plus
    # the (also double-buffered) resident params, 2x headroom, capped below the
    # v7x 64 MiB physical VMEM.
    out_isz = jnp.dtype(out_dtype).itemsize
    vmem_bytes = (2 * tm * D * x2d.dtype.itemsize
                  + 2 * tm * H * out_isz
                  + 2 * (D * H * w.dtype.itemsize
                         + 2 * D * gamma2.dtype.itemsize
                         + H * b2.dtype.itemsize))
    vmem_limit = int(min(max(2 * vmem_bytes, 4 << 20), 48 << 20))

    out = pl.pallas_call(
        _prenorm_linear_kernel,
        out_shape=jax.ShapeDtypeStruct((R, H), out_dtype),
        grid_spec=pltpu.PrefetchScalarGridSpec(
            num_scalar_prefetch=0,
            grid=(num_tiles,),
            in_specs=[
                pl.BlockSpec((tm, D), lambda i: (i, 0)),   # x row tile
                pl.BlockSpec((1, D), lambda i: (0, 0)),    # gamma (resident)
                pl.BlockSpec((1, D), lambda i: (0, 0)),    # beta  (resident)
                pl.BlockSpec((D, H), lambda i: (0, 0)),    # weight (resident)
                pl.BlockSpec((1, H), lambda i: (0, 0)),    # bias   (resident)
            ],
            out_specs=pl.BlockSpec((tm, H), lambda i: (i, 0)),
        ),
        compiler_params=pltpu.CompilerParams(
            dimension_semantics=("parallel",),
            vmem_limit_bytes=vmem_limit,
        ),
    )(x2d, gamma2, beta2, w, b2)

    return out.reshape(B, N, H)


# --------------------------------- reference ---------------------------------
def _ref_prenorm(x, gamma, beta, w, b):
    mean = jnp.mean(x, axis=-1, keepdims=True)
    var = jnp.mean((x - mean) ** 2, axis=-1, keepdims=True)
    normed = (x - mean) / jnp.sqrt(var + EPS) * gamma + beta
    return normed @ w + b


if __name__ == "__main__":
    # Lane-dense small shapes: D and H are multiples of 128; R = B*N = 512 rows
    # split into two 256-row tiles (even grid for v7x's 2 TensorCores, full
    # 256-row MXU tiles on v6e/v7x, 2x128 on v5e).
    B, N, D, H = 2, 256, 128, 256
    TM = 256

    key = jax.random.PRNGKey(0)
    kx, kg, kb, kw, kbias = jax.random.split(key, 5)

    x = jax.random.normal(kx, (B, N, D), dtype=jnp.float32)

    # LayerNorm params (PyTorch init: weight=1, bias=0; perturbed so the
    # affine path is exercised).
    gamma = jnp.ones((D,), jnp.float32) + 0.1 * jax.random.normal(kg, (D,), jnp.float32)
    beta = 0.1 * jax.random.normal(kb, (D,), jnp.float32)

    # fn = Linear(D, H). Kept f32 here so the 1e-4 check against the f32
    # reference holds; a bf16 weight automatically takes the bf16 MXU path.
    w = jax.random.normal(kw, (D, H), dtype=jnp.float32) / jnp.sqrt(D)
    bias = 0.01 * jax.random.normal(kbias, (H,), dtype=jnp.float32)

    out = prenorm_linear_pallas(x, gamma, beta, w, bias, tm=TM)
    out = jax.block_until_ready(out)

    ref = _ref_prenorm(x, gamma, beta, w, bias)
    assert out.shape == (B, N, H), out.shape
    assert jnp.allclose(out, ref, atol=1e-4, rtol=1e-4), float(
        jnp.max(jnp.abs(out - ref)))

    print("KERNEL_OK")
</pallas_src>

<mosaic_0001>
module attributes {stable_mosaic.version = 11 : i64} {
  func.func @_prenorm_linear_kernel(%arg0: i32, %arg1: memref<256x128xf32, #tpu.memory_space<vmem>>, %arg2: memref<1x128xf32, #tpu.memory_space<vmem>>, %arg3: memref<1x128xf32, #tpu.memory_space<vmem>>, %arg4: memref<128x256xf32, #tpu.memory_space<vmem>>, %arg5: memref<1x256xf32, #tpu.memory_space<vmem>>, %arg6: memref<256x256xf32, #tpu.memory_space<vmem>>) attributes {dimension_semantics = [#tpu.dimension_semantics<parallel>], iteration_bounds = array<i64: 2>, scalar_prefetch = 0 : i64, scratch_operands = 0 : i64, tpu.core_type = #tpu.core_type<tc>, window_params = [{transform_indices = @transform_0, window_bounds = array<i64: 256, 128>}, {pipeline_mode = #tpu.pipeline_mode<synchronous>, transform_indices = @transform_1, window_bounds = array<i64: 1, 128>}, {pipeline_mode = #tpu.pipeline_mode<synchronous>, transform_indices = @transform_2, window_bounds = array<i64: 1, 128>}, {pipeline_mode = #tpu.pipeline_mode<synchronous>, transform_indices = @transform_3, window_bounds = array<i64: 128, 256>}, {pipeline_mode = #tpu.pipeline_mode<synchronous>, transform_indices = @transform_4, window_bounds = array<i64: 1, 256>}, {transform_indices = @transform_5, window_bounds = array<i64: 256, 256>}]} {
    %c0 = arith.constant 0 : index
    %c0_0 = arith.constant 0 : index
    %0 = vector.load %arg1[%c0, %c0_0] : memref<256x128xf32, #tpu.memory_space<vmem>>, vector<256x128xf32>
    %cst = arith.constant dense<0.000000e+00> : vector<256xf32>
    %1 = vector.multi_reduction <add>, %0, %cst [1] : vector<256x128xf32> to vector<256xf32>
    %2 = vector.shape_cast %1 : vector<256xf32> to vector<256x1xf32>
    %3 = arith.mulf %0, %0 : vector<256x128xf32>
    %cst_1 = arith.constant dense<0.000000e+00> : vector<256xf32>
    %4 = vector.multi_reduction <add>, %3, %cst_1 [1] : vector<256x128xf32> to vector<256xf32>
    %5 = vector.shape_cast %4 : vector<256xf32> to vector<256x1xf32>
    %cst_2 = arith.constant 7.812500e-03 : f32
    %6 = vector.broadcast %cst_2 : f32 to vector<256x1xf32>
    %7 = arith.mulf %2, %6 : vector<256x1xf32>
    %cst_3 = arith.constant 7.812500e-03 : f32
    %8 = vector.broadcast %cst_3 : f32 to vector<256x1xf32>
    %9 = arith.mulf %5, %8 : vector<256x1xf32>
    %10 = arith.mulf %7, %7 : vector<256x1xf32>
    %11 = arith.subf %9, %10 : vector<256x1xf32>
    %cst_4 = arith.constant 0.000000e+00 : f32
    %12 = vector.broadcast %cst_4 : f32 to vector<256x1xf32>
    %13 = arith.maximumf %11, %12 : vector<256x1xf32>
    %cst_5 = arith.constant 9.99999974E-6 : f32
    %14 = vector.broadcast %cst_5 : f32 to vector<256x1xf32>
    %15 = arith.addf %13, %14 : vector<256x1xf32>
    %16 = math.rsqrt %15 : vector<256x1xf32>
    %17 = vector.broadcast %7 : vector<256x1xf32> to vector<256x128xf32>
    %18 = arith.subf %0, %17 : vector<256x128xf32>
    %19 = vector.broadcast %16 : vector<256x1xf32> to vector<256x128xf32>
    %20 = arith.mulf %18, %19 : vector<256x128xf32>
    %c0_6 = arith.constant 0 : index
    %c0_7 = arith.constant 0 : index
    %21 = vector.load %arg2[%c0_6, %c0_7] : memref<1x128xf32, #tpu.memory_space<vmem>>, vector<1x128xf32>
    %22 = vector.broadcast %21 : vector<1x128xf32> to vector<256x128xf32>
    %23 = arith.mulf %20, %22 : vector<256x128xf32>
    %c0_8 = arith.constant 0 : index
    %c0_9 = arith.constant 0 : index
    %24 = vector.load %arg3[%c0_8, %c0_9] : memref<1x128xf32, #tpu.memory_space<vmem>>, vector<1x128xf32>
    %25 = vector.broadcast %24 : vector<1x128xf32> to vector<256x128xf32>
    %26 = arith.addf %23, %25 : vector<256x128xf32>
    %c0_10 = arith.constant 0 : index
    %c0_11 = arith.constant 0 : index
    %27 = vector.load %arg4[%c0_10, %c0_11] : memref<128x256xf32, #tpu.memory_space<vmem>>, vector<128x256xf32>
    %cst_12 = arith.constant dense<0.000000e+00> : vector<256x256xf32>
    %28 = tpu.matmul %26, %27, %cst_12 {dimension_numbers = #tpu.dot_dimension_numbers<[1], [0], [0], [1], [0, 0, 1, 1], [], []>} : vector<256x128xf32>, vector<128x256xf32>, vector<256x256xf32> -> vector<256x256xf32>
    %c0_13 = arith.constant 0 : index
    %c0_14 = arith.constant 0 : index
    %29 = vector.load %arg5[%c0_13, %c0_14] : memref<1x256xf32, #tpu.memory_space<vmem>>, vector<1x256xf32>
    %30 = vector.broadcast %29 : vector<1x256xf32> to vector<256x256xf32>
    %31 = arith.addf %28, %30 : vector<256x256xf32>
    %c0_15 = arith.constant 0 : index
    %c0_16 = arith.constant 0 : index
    %32 = vector.load %arg6[%c0_15, %c0_16] : memref<256x256xf32, #tpu.memory_space<vmem>>, vector<256x256xf32>
    tpu.vector_store %arg6[%c0_15, %c0_16], %31 {strides = array<i32>} : memref<256x256xf32, #tpu.memory_space<vmem>>, vector<256x256xf32>,
    return
  }
  func.func @transform_0(%arg0: i32) -> (i32, i32) {
    %c0_i32 = arith.constant 0 : i32
    %c0_i32_0 = arith.constant 0 : i32
    return %arg0, %c0_i32 : i32, i32
  }
  func.func @transform_1(%arg0: i32) -> (i32, i32) {
    %c0_i32 = arith.constant 0 : i32
    %c0_i32_0 = arith.constant 0 : i32
    %c0_i32_1 = arith.constant 0 : i32
    return %c0_i32, %c0_i32_0 : i32, i32
  }
  func.func @transform_2(%arg0: i32) -> (i32, i32) {
    %c0_i32 = arith.constant 0 : i32
    %c0_i32_0 = arith.constant 0 : i32
    %c0_i32_1 = arith.constant 0 : i32
    return %c0_i32, %c0_i32_0 : i32, i32
  }
  func.func @transform_3(%arg0: i32) -> (i32, i32) {
    %c0_i32 = arith.constant 0 : i32
    %c0_i32_0 = arith.constant 0 : i32
    %c0_i32_1 = arith.constant 0 : i32
    return %c0_i32, %c0_i32_0 : i32, i32
  }
  func.func @transform_4(%arg0: i32) -> (i32, i32) {
    %c0_i32 = arith.constant 0 : i32
    %c0_i32_0 = arith.constant 0 : i32
    %c0_i32_1 = arith.constant 0 : i32
    return %c0_i32, %c0_i32_0 : i32, i32
  }
  func.func @transform_5(%arg0: i32) -> (i32, i32) {
    %c0_i32 = arith.constant 0 : i32
    %c0_i32_0 = arith.constant 0 : i32
    return %arg0, %c0_i32 : i32, i32
  }
}

</mosaic_0001>

<llo_original>
// kernel: tpu_custom_call.1
$region0: #{tpu_custom_call.1}
  #allocation0 [shape = 'u32[]', space=smem, size = 0x4, offset = 0x4, fixed_abs, tag = 'smem constant byte address 0x4 - core index']
  #allocation1 [shape = 'u32[144,128]{1,0:T(1,128)}', space=vmem, size = 0x12000, scoped, tag = 'internal scratch']
  %s0 = inlined_call_operand.hbm [shape: f32[512,128], index: 0, kind: input, shape index: {}]
  %s1 = inlined_call_operand.vmem [shape: f32[1,128], index: 1, kind: input, shape index: {}]
  %s2 = inlined_call_operand.vmem [shape: f32[1,128], index: 2, kind: input, shape index: {}]
  %s3 = inlined_call_operand.hbm [shape: f32[128,256], index: 3, kind: input, shape index: {}]
  %s4 = inlined_call_operand.vmem [shape: f32[1,256], index: 4, kind: input, shape index: {}]
  %s5 = inlined_call_operand.hbm [shape: f32[512,256], index: 5, kind: output, shape index: {}]
  %s6 = sld [smem:[#allocation0]]
  $region61: #{tpu_custom_call.1} parent=0
    _
  %s8 = ssub.s32 1, %s6
  %s9 = scalar_select 0, %s8, %s6
  $region1: #{tpu_custom_call.1} parent=0
    #allocation2 [shape = 'u8[262144]{0}', space=vmem, size = 0x40000, scoped, tag = 'input window, operand 0']
    #allocation3 [shape = 's32[2]{0}', space=sflag, size = 0x8, scoped, tag = 'scoped memory for tpu_custom_call.1']
    #allocation4 [shape = 's32[2]{0}', space=sflag, size = 0x8, scoped, tag = 'scoped memory for tpu_custom_call.1']
    #allocation5 [shape = 'u8[131072]{0}', space=vmem, size = 0x20000, scoped, tag = 'input window, operand 3, single buffered']
    #allocation6 [shape = 's32[1]{0}', space=sflag, size = 0x4, scoped, tag = 'scoped memory for tpu_custom_call.1']
    #allocation7 [shape = 'u8[524288]{0}', space=vmem, size = 0x80000, scoped, tag = 'output window, operand 0']
    %10 = vsyncpa [#allocation3], 0
    %s11 = scalar_lea.sflag [#allocation3], 1
    %12 = vsyncpa %s11, 0
    %13 = vsyncpa [#allocation6], 0
    %14 = vsyncpa [#allocation4], 0
    %s15 = scalar_lea.sflag [#allocation4], 1
    %16 = vsyncpa %s15, 0
    loop: start=0, step=1, limit=4
    $region2: #{tpu_custom_call.1} parent=1 // loop_pre_header
      _
    $region3: #{tpu_custom_call.1} parent=1 // loop_header
      %s18 = sphi 0, %s22
      %p19 = scmp.ge.s32.totalorder %s18, 4
      %s28 = sphi 0, %s30
      %s31 = sphi 0, %s28
      %s32 = sphi 0, %s31
      %s48 = sphi 0, %s32
      %s52 = sphi 0, %s52
      %s54 = sphi 0, %s52
      %s55 = sphi 0, %s54
      %s69 = sphi 0, %s55
      %s73 = sphi 0, %s73
      %s75 = sphi 0, %s73
      %s76 = sphi 0, %s75
      %s90 = sphi 0, %s76
      %s94 = sphi 0, %s94
      %s96 = sphi 0, %s94
      %s97 = sphi 0, %s96
      %s111 = sphi 0, %s97
      %s115 = sphi 0, %s115
      %s117 = sphi 0, %s115
      %s118 = sphi 0, %s117
      %s132 = sphi 0, %s118
      %s138 = sphi 0, %s140
      %s141 = sphi 0, %s138
      %s142 = sphi 0, %s141
      %s158 = sphi 0, %s142
    $region4: #{tpu_custom_call.1} parent=1 // loop_header_branch
      %21 = sbr.rel (%p19) target = $region8
    $region5: #{tpu_custom_call.1} parent=1 // loop_body
      %s23 = ssub.s32 %s18, 1
      %s24 = ssub.s32 %s18, 2
      %s25 = sadd.s32 %s18, 1
      %s26 = ssub.s32 %s18, %s25
      %p27 = scmp.eq.s32.totalorder %s26, 0
      %s29 = sadd.s32 %s28, 1
      %s30 = scalar_select %p27, %s28, %s29
      %p33 = pneg %p27
      %p34 = scmp.eq.s32.totalorder %s18, 1
      %p35 = por %p33, %p34
      %p36 = scmp.ne.s32.totalorder %s28, %s31
      %p37 = scmp.eq.s32.totalorder %s18, 0
      %p38 = por %p36, %p37
      %p39 = scmp.ne.s32.totalorder %s28, %s31
      %p40 = scmp.eq.s32.totalorder %s23, 1
      %p41 = por %p39, %p40
      %p42 = scmp.ne.s32.totalorder %s31, %s32
      %p43 = scmp.eq.s32.totalorder %s23, 0
      %p44 = por %p42, %p43
      %p45 = scmp.ne.s32.totalorder %s31, %s32
      %p46 = scmp.eq.s32.totalorder %s24, 1
      %p47 = por %p45, %p46
      %p49 = scmp.ne.s32.totalorder %s32, %s48
      %p50 = scmp.eq.s32.totalorder %s24, 0
      %p51 = por %p49, %p50
      %s53 = sadd.s32 %s52, 1
      %p56 = scmp.eq.s32.totalorder %s18, 1
      %p57 = scmp.ne.s32.totalorder %s52, %s54
      %p58 = scmp.eq.s32.totalorder %s18, 0
      %p59 = por %p57, %p58
      %p60 = scmp.ne.s32.totalorder %s52, %s54
      %p61 = scmp.eq.s32.totalorder %s23, 1
      %p62 = por %p60, %p61
      %p63 = scmp.ne.s32.totalorder %s54, %s55
      %p64 = scmp.eq.s32.totalorder %s23, 0
      %p65 = por %p63, %p64
      %p66 = scmp.ne.s32.totalorder %s54, %s55
      %p67 = scmp.eq.s32.totalorder %s24, 1
      %p68 = por %p66, %p67
      %p70 = scmp.ne.s32.totalorder %s55, %s69
      %p71 = scmp.eq.s32.totalorder %s24, 0
      %p72 = por %p70, %p71
      %s74 = sadd.s32 %s73, 1
      %p77 = scmp.eq.s32.totalorder %s18, 1
      %p78 = scmp.ne.s32.totalorder %s73, %s75
      %p79 = scmp.eq.s32.totalorder %s18, 0
      %p80 = por %p78, %p79
      %p81 = scmp.ne.s32.totalorder %s73, %s75
      %p82 = scmp.eq.s32.totalorder %s23, 1
      %p83 = por %p81, %p82
      %p84 = scmp.ne.s32.totalorder %s75, %s76
      %p85 = scmp.eq.s32.totalorder %s23, 0
      %p86 = por %p84, %p85
      %p87 = scmp.ne.s32.totalorder %s75, %s76
      %p88 = scmp.eq.s32.totalorder %s24, 1
      %p89 = por %p87, %p88
      %p91 = scmp.ne.s32.totalorder %s76, %s90
      %p92 = scmp.eq.s32.totalorder %s24, 0
      %p93 = por %p91, %p92
      %s95 = sadd.s32 %s94, 1
      %p98 = scmp.eq.s32.totalorder %s18, 1
      %p99 = scmp.ne.s32.totalorder %s94, %s96
      %p100 = scmp.eq.s32.totalorder %s18, 0
      %p101 = por %p99, %p100
      %p102 = scmp.ne.s32.totalorder %s94, %s96
      %p103 = scmp.eq.s32.totalorder %s23, 1
      %p104 = por %p102, %p103
      %p105 = scmp.ne.s32.totalorder %s96, %s97
      %p106 = scmp.eq.s32.totalorder %s23, 0
      %p107 = por %p105, %p106
      %p108 = scmp.ne.s32.totalorder %s96, %s97
      %p109 = scmp.eq.s32.totalorder %s24, 1
      %p110 = por %p108, %p109
      %p112 = scmp.ne.s32.totalorder %s97, %s111
      %p113 = scmp.eq.s32.totalorder %s24, 0
      %p114 = por %p112, %p113
      %s116 = sadd.s32 %s115, 1
      %p119 = scmp.eq.s32.totalorder %s18, 1
      %p120 = scmp.ne.s32.totalorder %s115, %s117
      %p121 = scmp.eq.s32.totalorder %s18, 0
      %p122 = por %p120, %p121
      %p123 = scmp.ne.s32.totalorder %s115, %s117
      %p124 = scmp.eq.s32.totalorder %s23, 1
      %p125 = por %p123, %p124
      %p126 = scmp.ne.s32.totalorder %s117, %s118
      %p127 = scmp.eq.s32.totalorder %s23, 0
      %p128 = por %p126, %p127
      %p129 = scmp.ne.s32.totalorder %s117, %s118
      %p130 = scmp.eq.s32.totalorder %s24, 1
      %p131 = por %p129, %p130
      %p133 = scmp.ne.s32.totalorder %s118, %s132
      %p134 = scmp.eq.s32.totalorder %s24, 0
      %p135 = por %p133, %p134
      %s136 = ssub.s32 %s18, %s25
      %p137 = scmp.eq.s32.totalorder %s136, 0
      %s139 = sadd.s32 %s138, 1
      %s140 = scalar_select %p137, %s138, %s139
      %p143 = pneg %p137
      %p144 = scmp.eq.s32.totalorder %s18, 1
      %p145 = por %p143, %p144
      %p146 = scmp.ne.s32.totalorder %s138, %s141
      %p147 = scmp.eq.s32.totalorder %s18, 0
      %p148 = por %p146, %p147
      %p149 = scmp.ne.s32.totalorder %s138, %s141
      %p150 = scmp.eq.s32.totalorder %s23, 1
      %p151 = por %p149, %p150
      %p152 = scmp.ne.s32.totalorder %s141, %s142
      %p153 = scmp.eq.s32.totalorder %s23, 0
      %p154 = por %p152, %p153
      %p155 = scmp.ne.s32.totalorder %s141, %s142
      %p156 = scmp.eq.s32.totalorder %s24, 1
      %p157 = por %p155, %p156
      %p159 = scmp.ne.s32.totalorder %s142, %s158
      %p160 = scmp.eq.s32.totalorder %s24, 0
      %p161 = por %p159, %p160
      %p162 = scmp.le.s32.totalorder 1, %s18
      %p163 = scmp.lt.s32.totalorder %s18, 3
      %p164 = pnand %p162, %p163
      %p165 = pneg %p164
      // Predicated region
      $region9: #{tpu_custom_call.1} parent=5 // pred_check
        _
      $region10: #{tpu_custom_call.1} parent=5 // pred_check_branch
        %167 = sbr.rel (%p164) target = $region12
      $region11: #{tpu_custom_call.1} parent=5 // pred_region
        %s168 = ssub.s32 %s18, 1
        // Predicated region
        $region13: #{tpu_custom_call.1} parent=11 // pred_check
          %p169 = pneg %p65
        $region14: #{tpu_custom_call.1} parent=11 // pred_check_branch
          %171 = sbr.rel (%p169) target = $region16
        $region15: #{tpu_custom_call.1} parent=11 // pred_region
          _
        $region16: #{tpu_custom_call.1} parent=11 // pred_fallthru
          _
        // Predicated region
        $region17: #{tpu_custom_call.1} parent=11 // pred_check
          %p172 = pneg %p86
        $region18: #{tpu_custom_call.1} parent=11 // pred_check_branch
          %174 = sbr.rel (%p172) target = $region20
        $region19: #{tpu_custom_call.1} parent=11 // pred_region
          _
        $region20: #{tpu_custom_call.1} parent=11 // pred_fallthru
          _
        // Predicated region
        $region21: #{tpu_custom_call.1} parent=11 // pred_check
          %p175 = pneg %p107
        $region22: #{tpu_custom_call.1} parent=11 // pred_check_branch
          %177 = sbr.rel (%p175) target = $region24
        $region23: #{tpu_custom_call.1} parent=11 // pred_region
          %s179 = ssub.s32 4096, 4096
          %180 = vsyncadd [#allocation6], %s179
          %s181 = sshll.u32 [#allocation5], 4
          %s182 = int_to_ptr.vmem [resolvable:$true] %s181
          %187 = dma.hbm_to_vmem [thread:$0]  %s3, 4096, %s182, [#allocation6], 256, 256, 16
        $region24: #{tpu_custom_call.1} parent=11 // pred_fallthru
          _
        // Predicated region
        $region25: #{tpu_custom_call.1} parent=11 // pred_check
          %p188 = pneg %p128
        $region26: #{tpu_custom_call.1} parent=11 // pred_check_branch
          %190 = sbr.rel (%p188) target = $region28
        $region27: #{tpu_custom_call.1} parent=11 // pred_region
          _
        $region28: #{tpu_custom_call.1} parent=11 // pred_fallthru
          _
      $region12: #{tpu_custom_call.1} parent=5 // pred_fallthru
        _
      %p191 = scmp.lt.s32.totalorder %s18, 2
      // Predicated region
      $region29: #{tpu_custom_call.1} parent=5 // pred_check
        %p192 = pneg %p191
      $region30: #{tpu_custom_call.1} parent=5 // pred_check_branch
        %194 = sbr.rel (%p192) target = $region32
      $region31: #{tpu_custom_call.1} parent=5 // pred_region
        // Predicated region
        $region33: #{tpu_custom_call.1} parent=31 // pred_check
          %p195 = pneg %p38
        $region34: #{tpu_custom_call.1} parent=31 // pred_check_branch
          %197 = sbr.rel (%p195) target = $region36
        $region35: #{tpu_custom_call.1} parent=31 // pred_region
          %s198 = sand.u32 %s28, 1
          %s199 = scalar_lea.sflag [#allocation3], %s198
          %s200 = sand.u32 %s28, 1
          %s201 = smul.addr %s200, 256
          %s202 = scalar_lea.vmem [#allocation2], %s201
          %s203 = smul.u32 32, %s18
          %s205 = ssub.s32 4096, 4096
          %206 = vsyncadd %s199, %s205
          %s207 = smul.addr %s203, 128
          %s208 = scalar_lea.hbm %s0, %s207
          %s209 = sshll.u32 %s202, 4
          %s210 = int_to_ptr.vmem [resolvable:$true] %s209
          %215 = dma.hbm_to_vmem [thread:$0]  %s208, 4096, %s210, %s199, 128, 128, 8
        $region36: #{tpu_custom_call.1} parent=31 // pred_fallthru
          _
      $region32: #{tpu_custom_call.1} parent=5 // pred_fallthru
        _
      %p216 = scmp.le.s32.totalorder 1, %s18
      %p217 = scmp.lt.s32.totalorder %s18, 3
      %p218 = pnand %p216, %p217
      %p219 = pneg %p218
      // Predicated region
      $region37: #{tpu_custom_call.1} parent=5 // pred_check
        _
      $region38: #{tpu_custom_call.1} parent=5 // pred_check_branch
        %221 = sbr.rel (%p218) target = $region40
      $region39: #{tpu_custom_call.1} parent=5 // pred_region
        %s222 = ssub.s32 %s18, 1
        %s223 = sand.u32 %s31, 1
        %s224 = scalar_lea.sflag [#allocation3], %s223
        %s225 = sand.u32 %s31, 1
        %s226 = smul.addr %s225, 256
        %s227 = scalar_lea.vmem [#allocation2], %s226
        // Predicated region
        $region41: #{tpu_custom_call.1} parent=39 // pred_check
          %p228 = pneg %p44
        $region42: #{tpu_custom_call.1} parent=39 // pred_check_branch
          %230 = sbr.rel (%p228) target = $region44
        $region43: #{tpu_custom_call.1} parent=39 // pred_region
          %231 = dma.done %s224, 4096
        $region44: #{tpu_custom_call.1} parent=39 // pred_fallthru
          _
        // Predicated region
        $region45: #{tpu_custom_call.1} parent=39 // pred_check
          %p232 = pneg %p107
        $region46: #{tpu_custom_call.1} parent=39 // pred_check_branch
          %234 = sbr.rel (%p232) target = $region48
        $region47: #{tpu_custom_call.1} parent=39 // pred_region
          %235 = dma.done [#allocation6], 4096
        $region48: #{tpu_custom_call.1} parent=39 // pred_fallthru
          _
        %s236 = sand.u32 %s31, 1
        %s237 = scalar_lea.sflag [#allocation3], %s236
        %s238 = sand.u32 %s31, 1
        %s239 = smul.addr %s238, 256
        %s240 = scalar_lea.vmem [#allocation2], %s239
        %p241 = pneg %p44
        %p242 = pneg %p41
        %p243 = pneg %p65
        %p244 = pneg %p62
        %p245 = pneg %p86
        %p246 = pneg %p83
        %p247 = pneg %p107
        %p248 = pneg %p104
        %p249 = pneg %p128
        %p250 = pneg %p125
        %p251 = pneg %p154
        %p252 = pneg %p151
        %s253 = sand.u32 %s141, 1
        %s254 = scalar_lea.sflag [#allocation4], %s253
        %s255 = sand.u32 %s141, 1
        %s256 = smul.addr %s255, 512
        %s257 = scalar_lea.vmem [#allocation7], %s256
        %s258 = smul.u32 32, %s23
        %s259 = smul.u32 32, %s23
        %v260 = vld [vmem:[%s227] sm:$0xff]
        %v261 = vld [vmem:[%s227 + $0x8] sm:$0xff]
        %v262 = vld [vmem:[%s227 + $0x10] sm:$0xff]
        %v263 = vld [vmem:[%s227 + $0x18] sm:$0xff]
        %v264 = vld [vmem:[%s227 + $0x20] sm:$0xff]
        %v265 = vld [vmem:[%s227 + $0x28] sm:$0xff]
        %v266 = vld [vmem:[%s227 + $0x30] sm:$0xff]
        %v267 = vld [vmem:[%s227 + $0x38] sm:$0xff]
        %v268 = vld [vmem:[%s227 + $0x40] sm:$0xff]
        %v269 = vld [vmem:[%s227 + $0x48] sm:$0xff]
        %v270 = vld [vmem:[%s227 + $0x50] sm:$0xff]
        %v271 = vld [vmem:[%s227 + $0x58] sm:$0xff]
        %v272 = vld [vmem:[%s227 + $0x60] sm:$0xff]
        %v273 = vld [vmem:[%s227 + $0x68] sm:$0xff]
        %v274 = vld [vmem:[%s227 + $0x70] sm:$0xff]
        %v275 = vld [vmem:[%s227 + $0x78] sm:$0xff]
        %v276 = vld [vmem:[%s227 + $0x80] sm:$0xff]
        %v277 = vld [vmem:[%s227 + $0x88] sm:$0xff]
        %v278 = vld [vmem:[%s227 + $0x90] sm:$0xff]
        %v279 = vld [vmem:[%s227 + $0x98] sm:$0xff]
        %v280 = vld [vmem:[%s227 + $0xa0] sm:$0xff]
        %v281 = vld [vmem:[%s227 + $0xa8] sm:$0xff]
        %v282 = vld [vmem:[%s227 + $0xb0] sm:$0xff]
        %v283 = vld [vmem:[%s227 + $0xb8] sm:$0xff]
        %v284 = vld [vmem:[%s227 + $0xc0] sm:$0xff]
        %v285 = vld [vmem:[%s227 + $0xc8] sm:$0xff]
        %v286 = vld [vmem:[%s227 + $0xd0] sm:$0xff]
        %v287 = vld [vmem:[%s227 + $0xd8] sm:$0xff]
        %v288 = vld [vmem:[%s227 + $0xe0] sm:$0xff]
        %v289 = vld [vmem:[%s227 + $0xe8] sm:$0xff]
        %v290 = vld [vmem:[%s227 + $0xf0] sm:$0xff]
        %v291 = vld [vmem:[%s227 + $0xf8] sm:$0xff]
        %292 = vadd.xlane.f32.xlu0 %v260
        %v293 = vpop.xlane.xlu0 %292
        %294 = vadd.xlane.f32.xlu0 %v261
        %v295 = vpop.xlane.xlu0 %294
        %296 = vadd.xlane.f32.xlu0 %v262
        %v297 = vpop.xlane.xlu0 %296
        %298 = vadd.xlane.f32.xlu0 %v263
        %v299 = vpop.xlane.xlu0 %298
        %300 = vadd.xlane.f32.xlu0 %v264
        %v301 = vpop.xlane.xlu0 %300
        %302 = vadd.xlane.f32.xlu0 %v265
        %v303 = vpop.xlane.xlu0 %302
        %304 = vadd.xlane.f32.xlu0 %v266
        %v305 = vpop.xlane.xlu0 %304
        %306 = vadd.xlane.f32.xlu0 %v267
        %v307 = vpop.xlane.xlu0 %306
        %308 = vadd.xlane.f32.xlu0 %v268
        %v309 = vpop.xlane.xlu0 %308
        %310 = vadd.xlane.f32.xlu0 %v269
        %v311 = vpop.xlane.xlu0 %310
        %312 = vadd.xlane.f32.xlu0 %v270
        %v313 = vpop.xlane.xlu0 %312
        %314 = vadd.xlane.f32.xlu0 %v271
        %v315 = vpop.xlane.xlu0 %314
        %316 = vadd.xlane.f32.xlu0 %v272
        %v317 = vpop.xlane.xlu0 %316
        %318 = vadd.xlane.f32.xlu0 %v273
        %v319 = vpop.xlane.xlu0 %318
        %320 = vadd.xlane.f32.xlu0 %v274
        %v321 = vpop.xlane.xlu0 %320
        %322 = vadd.xlane.f32.xlu0 %v275
        %v323 = vpop.xlane.xlu0 %322
        %324 = vadd.xlane.f32.xlu0 %v276
        %v325 = vpop.xlane.xlu0 %324
        %326 = vadd.xlane.f32.xlu0 %v277
        %v327 = vpop.xlane.xlu0 %326
        %328 = vadd.xlane.f32.xlu0 %v278
        %v329 = vpop.xlane.xlu0 %328
        %330 = vadd.xlane.f32.xlu0 %v279
        %v331 = vpop.xlane.xlu0 %330
        %332 = vadd.xlane.f32.xlu0 %v280
        %v333 = vpop.xlane.xlu0 %332
        %334 = vadd.xlane.f32.xlu0 %v281
        %v335 = vpop.xlane.xlu0 %334
        %336 = vadd.xlane.f32.xlu0 %v282
        %v337 = vpop.xlane.xlu0 %336
        %338 = vadd.xlane.f32.xlu0 %v283
        %v339 = vpop.xlane.xlu0 %338
        %340 = vadd.xlane.f32.xlu0 %v284
        %v341 = vpop.xlane.xlu0 %340
        %342 = vadd.xlane.f32.xlu0 %v285
        %v343 = vpop.xlane.xlu0 %342
        %344 = vadd.xlane.f32.xlu0 %v286
        %v345 = vpop.xlane.xlu0 %344
        %346 = vadd.xlane.f32.xlu0 %v287
        %v347 = vpop.xlane.xlu0 %346
        %348 = vadd.xlane.f32.xlu0 %v288
        %v349 = vpop.xlane.xlu0 %348
        %350 = vadd.xlane.f32.xlu0 %v289
        %v351 = vpop.xlane.xlu0 %350
        %352 = vadd.xlane.f32.xlu0 %v290
        %v353 = vpop.xlane.xlu0 %352
        %354 = vadd.xlane.f32.xlu0 %v291
        %v355 = vpop.xlane.xlu0 %354
        %v356 = vmul.f32 %v260, %v260
        %v357 = vmul.f32 %v261, %v261
        %v358 = vmul.f32 %v262, %v262
        %v359 = vmul.f32 %v263, %v263
        %v360 = vmul.f32 %v264, %v264
        %v361 = vmul.f32 %v265, %v265
        %v362 = vmul.f32 %v266, %v266
        %v363 = vmul.f32 %v267, %v267
        %v364 = vmul.f32 %v268, %v268
        %v365 = vmul.f32 %v269, %v269
        %v366 = vmul.f32 %v270, %v270
        %v367 = vmul.f32 %v271, %v271
        %v368 = vmul.f32 %v272, %v272
        %v369 = vmul.f32 %v273, %v273
        %v370 = vmul.f32 %v274, %v274
        %v371 = vmul.f32 %v275, %v275
        %v372 = vmul.f32 %v276, %v276
        %v373 = vmul.f32 %v277, %v277
        %v374 = vmul.f32 %v278, %v278
        %v375 = vmul.f32 %v279, %v279
        %v376 = vmul.f32 %v280, %v280
        %v377 = vmul.f32 %v281, %v281
        %v378 = vmul.f32 %v282, %v282
        %v379 = vmul.f32 %v283, %v283
        %v380 = vmul.f32 %v284, %v284
        %v381 = vmul.f32 %v285, %v285
        %v382 = vmul.f32 %v286, %v286
        %v383 = vmul.f32 %v287, %v287
        %v384 = vmul.f32 %v288, %v288
        %v385 = vmul.f32 %v289, %v289
        %v386 = vmul.f32 %v290, %v290
        %v387 = vmul.f32 %v291, %v291
        %388 = vadd.xlane.f32.xlu0 %v356
        %v389 = vpop.xlane.xlu0 %388
        %390 = vadd.xlane.f32.xlu0 %v357
        %v391 = vpop.xlane.xlu0 %390
        %392 = vadd.xlane.f32.xlu0 %v358
        %v393 = vpop.xlane.xlu0 %392
        %394 = vadd.xlane.f32.xlu0 %v359
        %v395 = vpop.xlane.xlu0 %394
        %396 = vadd.xlane.f32.xlu0 %v360
        %v397 = vpop.xlane.xlu0 %396
        %398 = vadd.xlane.f32.xlu0 %v361
        %v399 = vpop.xlane.xlu0 %398
        %400 = vadd.xlane.f32.xlu0 %v362
        %v401 = vpop.xlane.xlu0 %400
        %402 = vadd.xlane.f32.xlu0 %v363
        %v403 = vpop.xlane.xlu0 %402
        %404 = vadd.xlane.f32.xlu0 %v364
        %v405 = vpop.xlane.xlu0 %404
        %406 = vadd.xlane.f32.xlu0 %v365
        %v407 = vpop.xlane.xlu0 %406
        %408 = vadd.xlane.f32.xlu0 %v366
        %v409 = vpop.xlane.xlu0 %408
        %410 = vadd.xlane.f32.xlu0 %v367
        %v411 = vpop.xlane.xlu0 %410
        %412 = vadd.xlane.f32.xlu0 %v368
        %v413 = vpop.xlane.xlu0 %412
        %414 = vadd.xlane.f32.xlu0 %v369
        %v415 = vpop.xlane.xlu0 %414
        %416 = vadd.xlane.f32.xlu0 %v370
        %v417 = vpop.xlane.xlu0 %416
        %418 = vadd.xlane.f32.xlu0 %v371
        %v419 = vpop.xlane.xlu0 %418
        %420 = vadd.xlane.f32.xlu0 %v372
        %v421 = vpop.xlane.xlu0 %420
        %422 = vadd.xlane.f32.xlu0 %v373
        %v423 = vpop.xlane.xlu0 %422
        %424 = vadd.xlane.f32.xlu0 %v374
        %v425 = vpop.xlane.xlu0 %424
        %426 = vadd.xlane.f32.xlu0 %v375
        %v427 = vpop.xlane.xlu0 %426
        %428 = vadd.xlane.f32.xlu0 %v376
        %v429 = vpop.xlane.xlu0 %428
        %430 = vadd.xlane.f32.xlu0 %v377
        %v431 = vpop.xlane.xlu0 %430
        %432 = vadd.xlane.f32.xlu0 %v378
        %v433 = vpop.xlane.xlu0 %432
        %434 = vadd.xlane.f32.xlu0 %v379
        %v435 = vpop.xlane.xlu0 %434
        %436 = vadd.xlane.f32.xlu0 %v380
        %v437 = vpop.xlane.xlu0 %436
        %438 = vadd.xlane.f32.xlu0 %v381
        %v439 = vpop.xlane.xlu0 %438
        %440 = vadd.xlane.f32.xlu0 %v382
        %v441 = vpop.xlane.xlu0 %440
        %442 = vadd.xlane.f32.xlu0 %v383
        %v443 = vpop.xlane.xlu0 %442
        %444 = vadd.xlane.f32.xlu0 %v384
        %v445 = vpop.xlane.xlu0 %444
        %446 = vadd.xlane.f32.xlu0 %v385
        %v447 = vpop.xlane.xlu0 %446
        %448 = vadd.xlane.f32.xlu0 %v386
        %v449 = vpop.xlane.xlu0 %448
        %450 = vadd.xlane.f32.xlu0 %v387
        %v451 = vpop.xlane.xlu0 %450
        %v452 = vmul.f32 %v293, 0.0078125
        %v453 = vmul.f32 %v295, 0.0078125
        %v454 = vmul.f32 %v297, 0.0078125
        %v455 = vmul.f32 %v299, 0.0078125
        %v456 = vmul.f32 %v301, 0.0078125
        %v457 = vmul.f32 %v303, 0.0078125
        %v458 = vmul.f32 %v305, 0.0078125
        %v459 = vmul.f32 %v307, 0.0078125
        %v460 = vmul.f32 %v309, 0.0078125
        %v461 = vmul.f32 %v311, 0.0078125
        %v462 = vmul.f32 %v313, 0.0078125
        %v463 = vmul.f32 %v315, 0.0078125
        %v464 = vmul.f32 %v317, 0.0078125
        %v465 = vmul.f32 %v319, 0.0078125
        %v466 = vmul.f32 %v321, 0.0078125
        %v467 = vmul.f32 %v323, 0.0078125
        %v468 = vmul.f32 %v325, 0.0078125
        %v469 = vmul.f32 %v327, 0.0078125
        %v470 = vmul.f32 %v329, 0.0078125
        %v471 = vmul.f32 %v331, 0.0078125
        %v472 = vmul.f32 %v333, 0.0078125
        %v473 = vmul.f32 %v335, 0.0078125
        %v474 = vmul.f32 %v337, 0.0078125
        %v475 = vmul.f32 %v339, 0.0078125
        %v476 = vmul.f32 %v341, 0.0078125
        %v477 = vmul.f32 %v343, 0.0078125
        %v478 = vmul.f32 %v345, 0.0078125
        %v479 = vmul.f32 %v347, 0.0078125
        %v480 = vmul.f32 %v349, 0.0078125
        %v481 = vmul.f32 %v351, 0.0078125
        %v482 = vmul.f32 %v353, 0.0078125
        %v483 = vmul.f32 %v355, 0.0078125
        %v484 = vmul.f32 %v389, 0.0078125
        %v485 = vmul.f32 %v391, 0.0078125
        %v486 = vmul.f32 %v393, 0.0078125
        %v487 = vmul.f32 %v395, 0.0078125
        %v488 = vmul.f32 %v397, 0.0078125
        %v489 = vmul.f32 %v399, 0.0078125
        %v490 = vmul.f32 %v401, 0.0078125
        %v491 = vmul.f32 %v403, 0.0078125
        %v492 = vmul.f32 %v405, 0.0078125
        %v493 = vmul.f32 %v407, 0.0078125
        %v494 = vmul.f32 %v409, 0.0078125
        %v495 = vmul.f32 %v411, 0.0078125
        %v496 = vmul.f32 %v413, 0.0078125
        %v497 = vmul.f32 %v415, 0.0078125
        %v498 = vmul.f32 %v417, 0.0078125
        %v499 = vmul.f32 %v419, 0.0078125
        %v500 = vmul.f32 %v421, 0.0078125
        %v501 = vmul.f32 %v423, 0.0078125
        %v502 = vmul.f32 %v425, 0.0078125
        %v503 = vmul.f32 %v427, 0.0078125
        %v504 = vmul.f32 %v429, 0.0078125
        %v505 = vmul.f32 %v431, 0.0078125
        %v506 = vmul.f32 %v433, 0.0078125
        %v507 = vmul.f32 %v435, 0.0078125
        %v508 = vmul.f32 %v437, 0.0078125
        %v509 = vmul.f32 %v439, 0.0078125
        %v510 = vmul.f32 %v441, 0.0078125
        %v511 = vmul.f32 %v443, 0.0078125
        %v512 = vmul.f32 %v445, 0.0078125
        %v513 = vmul.f32 %v447, 0.0078125
        %v514 = vmul.f32 %v449, 0.0078125
        %v515 = vmul.f32 %v451, 0.0078125
        %v516 = vmul.f32 %v452, %v452
        %v517 = vmul.f32 %v453, %v453
        %v518 = vmul.f32 %v454, %v454
        %v519 = vmul.f32 %v455, %v455
        %v520 = vmul.f32 %v456, %v456
        %v521 = vmul.f32 %v457, %v457
        %v522 = vmul.f32 %v458, %v458
        %v523 = vmul.f32 %v459, %v459
        %v524 = vmul.f32 %v460, %v460
        %v525 = vmul.f32 %v461, %v461
        %v526 = vmul.f32 %v462, %v462
        %v527 = vmul.f32 %v463, %v463
        %v528 = vmul.f32 %v464, %v464
        %v529 = vmul.f32 %v465, %v465
        %v530 = vmul.f32 %v466, %v466
        %v531 = vmul.f32 %v467, %v467
        %v532 = vmul.f32 %v468, %v468
        %v533 = vmul.f32 %v469, %v469
        %v534 = vmul.f32 %v470, %v470
        %v535 = vmul.f32 %v471, %v471
        %v536 = vmul.f32 %v472, %v472
        %v537 = vmul.f32 %v473, %v473
        %v538 = vmul.f32 %v474, %v474
        %v539 = vmul.f32 %v475, %v475
        %v540 = vmul.f32 %v476, %v476
        %v541 = vmul.f32 %v477, %v477
        %v542 = vmul.f32 %v478, %v478
        %v543 = vmul.f32 %v479, %v479
        %v544 = vmul.f32 %v480, %v480
        %v545 = vmul.f32 %v481, %v481
        %v546 = vmul.f32 %v482, %v482
        %v547 = vmul.f32 %v483, %v483
        %v548 = vsub.f32 %v484, %v516
        %v549 = vsub.f32 %v485, %v517
        %v550 = vsub.f32 %v486, %v518
        %v551 = vsub.f32 %v487, %v519
        %v552 = vsub.f32 %v488, %v520
        %v553 = vsub.f32 %v489, %v521
        %v554 = vsub.f32 %v490, %v522
        %v555 = vsub.f32 %v491, %v523
        %v556 = vsub.f32 %v492, %v524
        %v557 = vsub.f32 %v493, %v525
        %v558 = vsub.f32 %v494, %v526
        %v559 = vsub.f32 %v495, %v527
        %v560 = vsub.f32 %v496, %v528
        %v561 = vsub.f32 %v497, %v529
        %v562 = vsub.f32 %v498, %v530
        %v563 = vsub.f32 %v499, %v531
        %v564 = vsub.f32 %v500, %v532
        %v565 = vsub.f32 %v501, %v533
        %v566 = vsub.f32 %v502, %v534
        %v567 = vsub.f32 %v503, %v535
        %v568 = vsub.f32 %v504, %v536
        %v569 = vsub.f32 %v505, %v537
        %v570 = vsub.f32 %v506, %v538
        %v571 = vsub.f32 %v507, %v539
        %v572 = vsub.f32 %v508, %v540
        %v573 = vsub.f32 %v509, %v541
        %v574 = vsub.f32 %v510, %v542
        %v575 = vsub.f32 %v511, %v543
        %v576 = vsub.f32 %v512, %v544
        %v577 = vsub.f32 %v513, %v545
        %v578 = vsub.f32 %v514, %v546
        %v579 = vsub.f32 %v515, %v547
        %v580 = vmax.f32 %v548, 0.0
        %v581 = vmax.f32 %v549, 0.0
        %v582 = vmax.f32 %v550, 0.0
        %v583 = vmax.f32 %v551, 0.0
        %v584 = vmax.f32 %v552, 0.0
        %v585 = vmax.f32 %v553, 0.0
        %v586 = vmax.f32 %v554, 0.0
        %v587 = vmax.f32 %v555, 0.0
        %v588 = vmax.f32 %v556, 0.0
        %v589 = vmax.f32 %v557, 0.0
        %v590 = vmax.f32 %v558, 0.0
        %v591 = vmax.f32 %v559, 0.0
        %v592 = vmax.f32 %v560, 0.0
        %v593 = vmax.f32 %v561, 0.0
        %v594 = vmax.f32 %v562, 0.0
        %v595 = vmax.f32 %v563, 0.0
        %v596 = vmax.f32 %v564, 0.0
        %v597 = vmax.f32 %v565, 0.0
        %v598 = vmax.f32 %v566, 0.0
        %v599 = vmax.f32 %v567, 0.0
        %v600 = vmax.f32 %v568, 0.0
        %v601 = vmax.f32 %v569, 0.0
        %v602 = vmax.f32 %v570, 0.0
        %v603 = vmax.f32 %v571, 0.0
        %v604 = vmax.f32 %v572, 0.0
        %v605 = vmax.f32 %v573, 0.0
        %v606 = vmax.f32 %v574, 0.0
        %v607 = vmax.f32 %v575, 0.0
        %v608 = vmax.f32 %v576, 0.0
        %v609 = vmax.f32 %v577, 0.0
        %v610 = vmax.f32 %v578, 0.0
        %v611 = vmax.f32 %v579, 0.0
        %v612 = vadd.f32 %v580, 1e-05
        %v613 = vadd.f32 %v581, 1e-05
        %v614 = vadd.f32 %v582, 1e-05
        %v615 = vadd.f32 %v583, 1e-05
        %v616 = vadd.f32 %v584, 1e-05
        %v617 = vadd.f32 %v585, 1e-05
        %v618 = vadd.f32 %v586, 1e-05
        %v619 = vadd.f32 %v587, 1e-05
        %v620 = vadd.f32 %v588, 1e-05
        %v621 = vadd.f32 %v589, 1e-05
        %v622 = vadd.f32 %v590, 1e-05
        %v623 = vadd.f32 %v591, 1e-05
        %v624 = vadd.f32 %v592, 1e-05
        %v625 = vadd.f32 %v593, 1e-05
        %v626 = vadd.f32 %v594, 1e-05
        %v627 = vadd.f32 %v595, 1e-05
        %v628 = vadd.f32 %v596, 1e-05
        %v629 = vadd.f32 %v597, 1e-05
        %v630 = vadd.f32 %v598, 1e-05
        %v631 = vadd.f32 %v599, 1e-05
        %v632 = vadd.f32 %v600, 1e-05
        %v633 = vadd.f32 %v601, 1e-05
        %v634 = vadd.f32 %v602, 1e-05
        %v635 = vadd.f32 %v603, 1e-05
        %v636 = vadd.f32 %v604, 1e-05
        %v637 = vadd.f32 %v605, 1e-05
        %v638 = vadd.f32 %v606, 1e-05
        %v639 = vadd.f32 %v607, 1e-05
        %v640 = vadd.f32 %v608, 1e-05
        %v641 = vadd.f32 %v609, 1e-05
        %v642 = vadd.f32 %v610, 1e-05
        %v643 = vadd.f32 %v611, 1e-05
        %v644 = vrsqrt.pop %v612
        %v645 = vrsqrt.pop %v613
        %v646 = vrsqrt.pop %v614
        %v647 = vrsqrt.pop %v615
        %v648 = vrsqrt.pop %v616
        %v649 = vrsqrt.pop %v617
        %v650 = vrsqrt.pop %v618
        %v651 = vrsqrt.pop %v619
        %v652 = vrsqrt.pop %v620
        %v653 = vrsqrt.pop %v621
        %v654 = vrsqrt.pop %v622
        %v655 = vrsqrt.pop %v623
        %v656 = vrsqrt.pop %v624
        %v657 = vrsqrt.pop %v625
        %v658 = vrsqrt.pop %v626
        %v659 = vrsqrt.pop %v627
        %v660 = vrsqrt.pop %v628
        %v661 = vrsqrt.pop %v629
        %v662 = vrsqrt.pop %v630
        %v663 = vrsqrt.pop %v631
        %v664 = vrsqrt.pop %v632
        %v665 = vrsqrt.pop %v633
        %v666 = vrsqrt.pop %v634
        %v667 = vrsqrt.pop %v635
        %v668 = vrsqrt.pop %v636
        %v669 = vrsqrt.pop %v637
        %v670 = vrsqrt.pop %v638
        %v671 = vrsqrt.pop %v639
        %v672 = vrsqrt.pop %v640
        %v673 = vrsqrt.pop %v641
        %v674 = vrsqrt.pop %v642
        %v675 = vrsqrt.pop %v643
        %v676 = vsub.f32 %v260, %v452
        %v677 = vsub.f32 %v261, %v453
        %v678 = vsub.f32 %v262, %v454
        %v679 = vsub.f32 %v263, %v455
        %v680 = vsub.f32 %v264, %v456
        %v681 = vsub.f32 %v265, %v457
        %v682 = vsub.f32 %v266, %v458
        %v683 = vsub.f32 %v267, %v459
        %v684 = vsub.f32 %v268, %v460
        %v685 = vsub.f32 %v269, %v461
        %v686 = vsub.f32 %v270, %v462
        %v687 = vsub.f32 %v271, %v463
        %v688 = vsub.f32 %v272, %v464
        %v689 = vsub.f32 %v273, %v465
        %v690 = vsub.f32 %v274, %v466
        %v691 = vsub.f32 %v275, %v467
        %v692 = vsub.f32 %v276, %v468
        %v693 = vsub.f32 %v277, %v469
        %v694 = vsub.f32 %v278, %v470
        %v695 = vsub.f32 %v279, %v471
        %v696 = vsub.f32 %v280, %v472
        %v697 = vsub.f32 %v281, %v473
        %v698 = vsub.f32 %v282, %v474
        %v699 = vsub.f32 %v283, %v475
        %v700 = vsub.f32 %v284, %v476
        %v701 = vsub.f32 %v285, %v477
        %v702 = vsub.f32 %v286, %v478
        %v703 = vsub.f32 %v287, %v479
        %v704 = vsub.f32 %v288, %v480
        %v705 = vsub.f32 %v289, %v481
        %v706 = vsub.f32 %v290, %v482
        %v707 = vsub.f32 %v291, %v483
        %v708 = vmul.f32 %v676, %v644
        %v709 = vmul.f32 %v677, %v645
        %v710 = vmul.f32 %v678, %v646
        %v711 = vmul.f32 %v679, %v647
        %v712 = vmul.f32 %v680, %v648
        %v713 = vmul.f32 %v681, %v649
        %v714 = vmul.f32 %v682, %v650
        %v715 = vmul.f32 %v683, %v651
        %v716 = vmul.f32 %v684, %v652
        %v717 = vmul.f32 %v685, %v653
        %v718 = vmul.f32 %v686, %v654
        %v719 = vmul.f32 %v687, %v655
        %v720 = vmul.f32 %v688, %v656
        %v721 = vmul.f32 %v689, %v657
        %v722 = vmul.f32 %v690, %v658
        %v723 = vmul.f32 %v691, %v659
        %v724 = vmul.f32 %v692, %v660
        %v725 = vmul.f32 %v693, %v661
        %v726 = vmul.f32 %v694, %v662
        %v727 = vmul.f32 %v695, %v663
        %v728 = vmul.f32 %v696, %v664
        %v729 = vmul.f32 %v697, %v665
        %v730 = vmul.f32 %v698, %v666
        %v731 = vmul.f32 %v699, %v667
        %v732 = vmul.f32 %v700, %v668
        %v733 = vmul.f32 %v701, %v669
        %v734 = vmul.f32 %v702, %v670
        %v735 = vmul.f32 %v703, %v671
        %v736 = vmul.f32 %v704, %v672
        %v737 = vmul.f32 %v705, %v673
        %v738 = vmul.f32 %v706, %v674
        %v739 = vmul.f32 %v707, %v675
        %v740 = vld [vmem:[%s1] sm:$0x1]
        %v742 = vlaneseq
        %v743 = vshrl.u32 %v742, 7
        %v744 = vsub.s32 0, %v743
        %v745 = vrot.slane %v740, %v744
        %v747 = vmul.f32 %v708, %v745
        %v748 = vmul.f32 %v709, %v745
        %v749 = vmul.f32 %v710, %v745
        %v750 = vmul.f32 %v711, %v745
        %v751 = vmul.f32 %v712, %v745
        %v752 = vmul.f32 %v713, %v745
        %v753 = vmul.f32 %v714, %v745
        %v754 = vmul.f32 %v715, %v745
        %v755 = vmul.f32 %v716, %v745
        %v756 = vmul.f32 %v717, %v745
        %v757 = vmul.f32 %v718, %v745
        %v758 = vmul.f32 %v719, %v745
        %v759 = vmul.f32 %v720, %v745
        %v760 = vmul.f32 %v721, %v745
        %v761 = vmul.f32 %v722, %v745
        %v762 = vmul.f32 %v723, %v745
        %v763 = vmul.f32 %v724, %v745
        %v764 = vmul.f32 %v725, %v745
        %v765 = vmul.f32 %v726, %v745
        %v766 = vmul.f32 %v727, %v745
        %v767 = vmul.f32 %v728, %v745
        %v768 = vmul.f32 %v729, %v745
        %v769 = vmul.f32 %v730, %v745
        %v770 = vmul.f32 %v731, %v745
        %v771 = vmul.f32 %v732, %v745
        %v772 = vmul.f32 %v733, %v745
        %v773 = vmul.f32 %v734, %v745
        %v774 = vmul.f32 %v735, %v745
        %v775 = vmul.f32 %v736, %v745
        %v776 = vmul.f32 %v737, %v745
        %v777 = vmul.f32 %v738, %v745
        %v778 = vmul.f32 %v739, %v745
        %v779 = vld [vmem:[%s2] sm:$0x1]
        %v781 = vlaneseq
        %v782 = vshrl.u32 %v781, 7
        %v783 = vsub.s32 0, %v782
        %v784 = vrot.slane %v779, %v783
        %v786 = vadd.f32 %v747, %v784
        %v787 = vadd.f32 %v748, %v784
        %v788 = vadd.f32 %v749, %v784
        %v789 = vadd.f32 %v750, %v784
        %v790 = vadd.f32 %v751, %v784
        %v791 = vadd.f32 %v752, %v784
        %v792 = vadd.f32 %v753, %v784
        %v793 = vadd.f32 %v754, %v784
        %v794 = vadd.f32 %v755, %v784
        %v795 = vadd.f32 %v756, %v784
        %v796 = vadd.f32 %v757, %v784
        %v797 = vadd.f32 %v758, %v784
        %v798 = vadd.f32 %v759, %v784
        %v799 = vadd.f32 %v760, %v784
        %v800 = vadd.f32 %v761, %v784
        %v801 = vadd.f32 %v762, %v784
        %v802 = vadd.f32 %v763, %v784
        %v803 = vadd.f32 %v764, %v784
        %v804 = vadd.f32 %v765, %v784
        %v805 = vadd.f32 %v766, %v784
        %v806 = vadd.f32 %v767, %v784
        %v807 = vadd.f32 %v768, %v784
        %v808 = vadd.f32 %v769, %v784
        %v809 = vadd.f32 %v770, %v784
        %v810 = vadd.f32 %v771, %v784
        %v811 = vadd.f32 %v772, %v784
        %v812 = vadd.f32 %v773, %v784
        %v813 = vadd.f32 %v774, %v784
        %v814 = vadd.f32 %v775, %v784
        %v815 = vadd.f32 %v776, %v784
        %v816 = vadd.f32 %v777, %v784
        %v817 = vadd.f32 %v778, %v784
        %v818 = vld [vmem:[#allocation5] sm:$0xff]
        %v819 = vld [vmem:[#allocation5 + $0x8] sm:$0xff]
        %v820 = vld [vmem:[#allocation5 + $0x10] sm:$0xff]
        %v821 = vld [vmem:[#allocation5 + $0x18] sm:$0xff]
        %v822 = vld [vmem:[#allocation5 + $0x20] sm:$0xff]
        %v823 = vld [vmem:[#allocation5 + $0x28] sm:$0xff]
        %v824 = vld [vmem:[#allocation5 + $0x30] sm:$0xff]
        %v825 = vld [vmem:[#allocation5 + $0x38] sm:$0xff]
        %v826 = vld [vmem:[#allocation5 + $0x40] sm:$0xff]
        %v827 = vld [vmem:[#allocation5 + $0x48] sm:$0xff]
        %v828 = vld [vmem:[#allocation5 + $0x50] sm:$0xff]
        %v829 = vld [vmem:[#allocation5 + $0x58] sm:$0xff]
        %v830 = vld [vmem:[#allocation5 + $0x60] sm:$0xff]
        %v831 = vld [vmem:[#allocation5 + $0x68] sm:$0xff]
        %v832 = vld [vmem:[#allocation5 + $0x70] sm:$0xff]
        %v833 = vld [vmem:[#allocation5 + $0x78] sm:$0xff]
        %v834 = vld [vmem:[#allocation5 + $0x80] sm:$0xff]
        %v835 = vld [vmem:[#allocation5 + $0x88] sm:$0xff]
        %v836 = vld [vmem:[#allocation5 + $0x90] sm:$0xff]
        %v837 = vld [vmem:[#allocation5 + $0x98] sm:$0xff]
        %v838 = vld [vmem:[#allocation5 + $0xa0] sm:$0xff]
        %v839 = vld [vmem:[#allocation5 + $0xa8] sm:$0xff]
        %v840 = vld [vmem:[#allocation5 + $0xb0] sm:$0xff]
        %v841 = vld [vmem:[#allocation5 + $0xb8] sm:$0xff]
        %v842 = vld [vmem:[#allocation5 + $0xc0] sm:$0xff]
        %v843 = vld [vmem:[#allocation5 + $0xc8] sm:$0xff]
        %v844 = vld [vmem:[#allocation5 + $0xd0] sm:$0xff]
        %v845 = vld [vmem:[#allocation5 + $0xd8] sm:$0xff]
        %v846 = vld [vmem:[#allocation5 + $0xe0] sm:$0xff]
        %v847 = vld [vmem:[#allocation5 + $0xe8] sm:$0xff]
        %v848 = vld [vmem:[#allocation5 + $0xf0] sm:$0xff]
        %v849 = vld [vmem:[#allocation5 + $0xf8] sm:$0xff]
        %v850 = vld [vmem:[%s4] sm:$0x3]
        %v852 = vlaneseq
        %v853 = vshrl.u32 %v852, 7
        %v854 = vsub.s32 0, %v853
        %v855 = vrot.slane %v850, %v854
        %v856 = vlaneseq
        %v857 = vshrl.u32 %v856, 7
        %v858 = vsub.s32 1, %v857
        %v859 = vrot.slane %v850, %v858
        %862 = vmatprep.subr.mxu0 %v819
        %863 = vmatpush1.msra.mxu0 %v818
        %864 = vmatprep.subr.mxu0 %v821
        %865 = vmatpush1.msra.mxu0 %v820
        %866 = vmatprep.subr.mxu0 %v823
        %867 = vmatpush1.msra.mxu0 %v822
        %868 = vmatprep.subr.mxu0 %v825
        %869 = vmatpush1.msra.mxu0 %v824
        %870 = vmatprep.subr.mxu0 %v827
        %871 = vmatpush1.msra.mxu0 %v826
        %872 = vmatprep.subr.mxu0 %v829
        %873 = vmatpush1.msra.mxu0 %v828
        %874 = vmatprep.subr.mxu0 %v831
        %875 = vmatpush1.msra.mxu0 %v830
        %876 = vmatprep.subr.mxu0 %v833
        %877 = vmatpush1.msra.mxu0 %v832
        %878 = vmatprep.subr.mxu0 %v835
        %879 = vmatpush1.msra.mxu0 %v834
        %880 = vmatprep.subr.mxu0 %v837
        %881 = vmatpush1.msra.mxu0 %v836
        %882 = vmatprep.subr.mxu0 %v839
        %883 = vmatpush1.msra.mxu0 %v838
        %884 = vmatprep.subr.mxu0 %v841
        %885 = vmatpush1.msra.mxu0 %v840
        %886 = vmatprep.subr.mxu0 %v843
        %887 = vmatpush1.msra.mxu0 %v842
        %888 = vmatprep.subr.mxu0 %v845
        %889 = vmatpush1.msra.mxu0 %v844
        %890 = vmatprep.subr.mxu0 %v847
        %891 = vmatpush1.msra.mxu0 %v846
        %892 = vmatprep.subr.mxu0 %v849
        %893 = vmatpush1.msra.mxu0 %v848
        %894 = vmatprep.subr.mxu0 0.0
        %895 = vmatpush1.msra.mxu0 0.0
        %896 = vmatprep.subr.mxu0 0.0
        %897 = vmatpush1.msra.mxu0 0.0
        %898 = vmatprep.subr.mxu0 0.0
        %899 = vmatpush1.msra.mxu0 0.0
        %900 = vmatprep.subr.mxu0 0.0
        %901 = vmatpush1.msra.mxu0 0.0
        %902 = vmatprep.subr.mxu0 0.0
        %903 = vmatpush1.msra.mxu0 0.0
        %904 = vmatprep.subr.mxu0 0.0
        %905 = vmatpush1.msra.mxu0 0.0
        %906 = vmatprep.subr.mxu0 0.0
        %907 = vmatpush1.msra.mxu0 0.0
        %908 = vmatprep.subr.mxu0 0.0
        %909 = vmatpush1.msra.mxu0 0.0
        %910 = vmatprep.subr.mxu0 0.0
        %911 = vmatpush1.msra.mxu0 0.0
        %912 = vmatprep.subr.mxu0 0.0
        %913 = vmatpush1.msra.mxu0 0.0
        %914 = vmatprep.subr.mxu0 0.0
        %915 = vmatpush1.msra.mxu0 0.0
        %916 = vmatprep.subr.mxu0 0.0
        %917 = vmatpush1.msra.mxu0 0.0
        %918 = vmatprep.subr.mxu0 0.0
        %919 = vmatpush1.msra.mxu0 0.0
        %920 = vmatprep.subr.mxu0 0.0
        %921 = vmatpush1.msra.mxu0 0.0
        %922 = vmatprep.subr.mxu0 0.0
        %923 = vmatpush1.msra.mxu0 0.0
        %924 = vmatprep.subr.mxu0 0.0
        %925 = vmatpush1.msra.mxu0 0.0
        %926 = vmatprep.mubr.f32.mxu0 0.0
        %927 = vmatmul.mubr.f32.gmra.mrb[0].mxu0 %v786
        %v928 = vpop.f32.mrb[0].mxu0
        %v929 = vadd.f32 %v855, %v928
        %v930 = vpop.f32.mrb[0].mxu0
        %v931 = vadd.f32 %v859, %v930
        %932 = vmatprep.mubr.f32.mxu0 0.0
        %933 = vmatmul.mubr.f32.gmra.mrb[0].mxu0 %v787
        %v934 = vpop.f32.mrb[0].mxu0
        %v935 = vadd.f32 %v855, %v934
        %v936 = vpop.f32.mrb[0].mxu0
        %v937 = vadd.f32 %v859, %v936
        %938 = vmatprep.mubr.f32.mxu0 0.0
        %939 = vmatmul.mubr.f32.gmra.mrb[0].mxu0 %v788
        %v940 = vpop.f32.mrb[0].mxu0
        %v941 = vadd.f32 %v855, %v940
        %v942 = vpop.f32.mrb[0].mxu0
        %v943 = vadd.f32 %v859, %v942
        %944 = vmatprep.mubr.f32.mxu0 0.0
        %945 = vmatmul.mubr.f32.gmra.mrb[0].mxu0 %v789
        %v946 = vpop.f32.mrb[0].mxu0
        %v947 = vadd.f32 %v855, %v946
        %v948 = vpop.f32.mrb[0].mxu0
        %v949 = vadd.f32 %v859, %v948
        %950 = vmatprep.mubr.f32.mxu0 0.0
        %951 = vmatmul.mubr.f32.gmra.mrb[0].mxu0 %v790
        %v952 = vpop.f32.mrb[0].mxu0
        %v953 = vadd.f32 %v855, %v952
        %v954 = vpop.f32.mrb[0].mxu0
        %v955 = vadd.f32 %v859, %v954
        %956 = vmatprep.mubr.f32.mxu0 0.0
        %957 = vmatmul.mubr.f32.gmra.mrb[0].mxu0 %v791
        %v958 = vpop.f32.mrb[0].mxu0
        %v959 = vadd.f32 %v855, %v958
        %v960 = vpop.f32.mrb[0].mxu0
        %v961 = vadd.f32 %v859, %v960
        %962 = vmatprep.mubr.f32.mxu0 0.0
        %963 = vmatmul.mubr.f32.gmra.mrb[0].mxu0 %v792
        %v964 = vpop.f32.mrb[0].mxu0
        %v965 = vadd.f32 %v855, %v964
        %v966 = vpop.f32.mrb[0].mxu0
        %v967 = vadd.f32 %v859, %v966
        %968 = vmatprep.mubr.f32.mxu0 0.0
        %969 = vmatmul.mubr.f32.gmra.mrb[0].mxu0 %v793
        %v970 = vpop.f32.mrb[0].mxu0
        %v971 = vadd.f32 %v855, %v970
        %v972 = vpop.f32.mrb[0].mxu0
        %v973 = vadd.f32 %v859, %v972
        %974 = vmatprep.mubr.f32.mxu0 0.0
        %975 = vmatmul.mubr.f32.gmra.mrb[0].mxu0 %v794
        %v976 = vpop.f32.mrb[0].mxu0
        %v977 = vadd.f32 %v855, %v976
        %v978 = vpop.f32.mrb[0].mxu0
        %v979 = vadd.f32 %v859, %v978
        %980 = vmatprep.mubr.f32.mxu0 0.0
        %981 = vmatmul.mubr.f32.gmra.mrb[0].mxu0 %v795
        %v982 = vpop.f32.mrb[0].mxu0
        %v983 = vadd.f32 %v855, %v982
        %v984 = vpop.f32.mrb[0].mxu0
        %v985 = vadd.f32 %v859, %v984
        %986 = vmatprep.mubr.f32.mxu0 0.0
        %987 = vmatmul.mubr.f32.gmra.mrb[0].mxu0 %v796
        %v988 = vpop.f32.mrb[0].mxu0
        %v989 = vadd.f32 %v855, %v988
        %v990 = vpop.f32.mrb[0].mxu0
        %v991 = vadd.f32 %v859, %v990
        %992 = vmatprep.mubr.f32.mxu0 0.0
        %993 = vmatmul.mubr.f32.gmra.mrb[0].mxu0 %v797
        %v994 = vpop.f32.mrb[0].mxu0
        %v995 = vadd.f32 %v855, %v994
        %v996 = vpop.f32.mrb[0].mxu0
        %v997 = vadd.f32 %v859, %v996
        %998 = vmatprep.mubr.f32.mxu0 0.0
        %999 = vmatmul.mubr.f32.gmra.mrb[0].mxu0 %v798
        %v1000 = vpop.f32.mrb[0].mxu0
        %v1001 = vadd.f32 %v855, %v1000
        %v1002 = vpop.f32.mrb[0].mxu0
        %v1003 = vadd.f32 %v859, %v1002
        %1004 = vmatprep.mubr.f32.mxu0 0.0
        %1005 = vmatmul.mubr.f32.gmra.mrb[0].mxu0 %v799
        %v1006 = vpop.f32.mrb[0].mxu0
        %v1007 = vadd.f32 %v855, %v1006
        %v1008 = vpop.f32.mrb[0].mxu0
        %v1009 = vadd.f32 %v859, %v1008
        %1010 = vmatprep.mubr.f32.mxu0 0.0
        %1011 = vmatmul.mubr.f32.gmra.mrb[0].mxu0 %v800
        %v1012 = vpop.f32.mrb[0].mxu0
        %v1013 = vadd.f32 %v855, %v1012
        %v1014 = vpop.f32.mrb[0].mxu0
        %v1015 = vadd.f32 %v859, %v1014
        %1016 = vmatprep.mubr.f32.mxu0 0.0
        %1017 = vmatmul.mubr.f32.gmra.mrb[0].mxu0 %v801
        %v1018 = vpop.f32.mrb[0].mxu0
        %v1019 = vadd.f32 %v855, %v1018
        %v1020 = vpop.f32.mrb[0].mxu0
        %v1021 = vadd.f32 %v859, %v1020
        %1022 = vmatprep.mubr.f32.mxu0 0.0
        %1023 = vmatmul.mubr.f32.gmra.mrb[0].mxu0 %v802
        %v1024 = vpop.f32.mrb[0].mxu0
        %v1025 = vadd.f32 %v855, %v1024
        %v1026 = vpop.f32.mrb[0].mxu0
        %v1027 = vadd.f32 %v859, %v1026
        %1028 = vmatprep.mubr.f32.mxu0 0.0
        %1029 = vmatmul.mubr.f32.gmra.mrb[0].mxu0 %v803
        %v1030 = vpop.f32.mrb[0].mxu0
        %v1031 = vadd.f32 %v855, %v1030
        %v1032 = vpop.f32.mrb[0].mxu0
        %v1033 = vadd.f32 %v859, %v1032
        %1034 = vmatprep.mubr.f32.mxu0 0.0
        %1035 = vmatmul.mubr.f32.gmra.mrb[0].mxu0 %v804
        %v1036 = vpop.f32.mrb[0].mxu0
        %v1037 = vadd.f32 %v855, %v1036
        %v1038 = vpop.f32.mrb[0].mxu0
        %v1039 = vadd.f32 %v859, %v1038
        %1040 = vmatprep.mubr.f32.mxu0 0.0
        %1041 = vmatmul.mubr.f32.gmra.mrb[0].mxu0 %v805
        %v1042 = vpop.f32.mrb[0].mxu0
        %v1043 = vadd.f32 %v855, %v1042
        %v1044 = vpop.f32.mrb[0].mxu0
        %v1045 = vadd.f32 %v859, %v1044
        %1046 = vmatprep.mubr.f32.mxu0 0.0
        %1047 = vmatmul.mubr.f32.gmra.mrb[0].mxu0 %v806
        %v1048 = vpop.f32.mrb[0].mxu0
        %v1049 = vadd.f32 %v855, %v1048
        %v1050 = vpop.f32.mrb[0].mxu0
        %v1051 = vadd.f32 %v859, %v1050
        %1052 = vmatprep.mubr.f32.mxu0 0.0
        %1053 = vmatmul.mubr.f32.gmra.mrb[0].mxu0 %v807
        %v1054 = vpop.f32.mrb[0].mxu0
        %v1055 = vadd.f32 %v855, %v1054
        %v1056 = vpop.f32.mrb[0].mxu0
        %v1057 = vadd.f32 %v859, %v1056
        %1058 = vmatprep.mubr.f32.mxu0 0.0
        %1059 = vmatmul.mubr.f32.gmra.mrb[0].mxu0 %v808
        %v1060 = vpop.f32.mrb[0].mxu0
        %v1061 = vadd.f32 %v855, %v1060
        %v1062 = vpop.f32.mrb[0].mxu0
        %v1063 = vadd.f32 %v859, %v1062
        %1064 = vmatprep.mubr.f32.mxu0 0.0
        %1065 = vmatmul.mubr.f32.gmra.mrb[0].mxu0 %v809
        %v1066 = vpop.f32.mrb[0].mxu0
        %v1067 = vadd.f32 %v855, %v1066
        %v1068 = vpop.f32.mrb[0].mxu0
        %v1069 = vadd.f32 %v859, %v1068
        %1070 = vmatprep.mubr.f32.mxu0 0.0
        %1071 = vmatmul.mubr.f32.gmra.mrb[0].mxu0 %v810
        %v1072 = vpop.f32.mrb[0].mxu0
        %v1073 = vadd.f32 %v855, %v1072
        %v1074 = vpop.f32.mrb[0].mxu0
        %v1075 = vadd.f32 %v859, %v1074
        %1076 = vmatprep.mubr.f32.mxu0 0.0
        %1077 = vmatmul.mubr.f32.gmra.mrb[0].mxu0 %v811
        %v1078 = vpop.f32.mrb[0].mxu0
        %v1079 = vadd.f32 %v855, %v1078
        %v1080 = vpop.f32.mrb[0].mxu0
        %v1081 = vadd.f32 %v859, %v1080
        %1082 = vmatprep.mubr.f32.mxu0 0.0
        %1083 = vmatmul.mubr.f32.gmra.mrb[0].mxu0 %v812
        %v1084 = vpop.f32.mrb[0].mxu0
        %v1085 = vadd.f32 %v855, %v1084
        %v1086 = vpop.f32.mrb[0].mxu0
        %v1087 = vadd.f32 %v859, %v1086
        %1088 = vmatprep.mubr.f32.mxu0 0.0
        %1089 = vmatmul.mubr.f32.gmra.mrb[0].mxu0 %v813
        %v1090 = vpop.f32.mrb[0].mxu0
        %v1091 = vadd.f32 %v855, %v1090
        %v1092 = vpop.f32.mrb[0].mxu0
        %v1093 = vadd.f32 %v859, %v1092
        %1094 = vmatprep.mubr.f32.mxu0 0.0
        %1095 = vmatmul.mubr.f32.gmra.mrb[0].mxu0 %v814
        %v1096 = vpop.f32.mrb[0].mxu0
        %v1097 = vadd.f32 %v855, %v1096
        %v1098 = vpop.f32.mrb[0].mxu0
        %v1099 = vadd.f32 %v859, %v1098
        %1100 = vmatprep.mubr.f32.mxu0 0.0
        %1101 = vmatmul.mubr.f32.gmra.mrb[0].mxu0 %v815
        %v1102 = vpop.f32.mrb[0].mxu0
        %v1103 = vadd.f32 %v855, %v1102
        %v1104 = vpop.f32.mrb[0].mxu0
        %v1105 = vadd.f32 %v859, %v1104
        %1106 = vmatprep.mubr.f32.mxu0 0.0
        %1107 = vmatmul.mubr.f32.gmra.mrb[0].mxu0 %v816
        %v1108 = vpop.f32.mrb[0].mxu0
        %v1109 = vadd.f32 %v855, %v1108
        %v1110 = vpop.f32.mrb[0].mxu0
        %v1111 = vadd.f32 %v859, %v1110
        %1112 = vmatprep.mubr.f32.mxu0 0.0
        %1113 = vmatmul.mubr.f32.gmra.mrb[0].mxu0 %v817
        %v1114 = vpop.f32.mrb[0].mxu0
        %v1115 = vadd.f32 %v855, %v1114
        %v1116 = vpop.f32.mrb[0].mxu0
        %v1117 = vadd.f32 %v859, %v1116
        %1118 = vdwg.mxu0
        %1119 = vst [vmem:[%s257] sm:$0xff] %v929
        %1120 = vst [vmem:[%s257 + $0x8] sm:$0xff] %v931
        %1121 = vst [vmem:[%s257 + $0x10] sm:$0xff] %v935
        %1122 = vst [vmem:[%s257 + $0x18] sm:$0xff] %v937
        %1123 = vst [vmem:[%s257 + $0x20] sm:$0xff] %v941
        %1124 = vst [vmem:[%s257 + $0x28] sm:$0xff] %v943
        %1125 = vst [vmem:[%s257 + $0x30] sm:$0xff] %v947
        %1126 = vst [vmem:[%s257 + $0x38] sm:$0xff] %v949
        %1127 = vst [vmem:[%s257 + $0x40] sm:$0xff] %v953
        %1128 = vst [vmem:[%s257 + $0x48] sm:$0xff] %v955
        %1129 = vst [vmem:[%s257 + $0x50] sm:$0xff] %v959
        %1130 = vst [vmem:[%s257 + $0x58] sm:$0xff] %v961
        %1131 = vst [vmem:[%s257 + $0x60] sm:$0xff] %v965
        %1132 = vst [vmem:[%s257 + $0x68] sm:$0xff] %v967
        %1133 = vst [vmem:[%s257 + $0x70] sm:$0xff] %v971
        %1134 = vst [vmem:[%s257 + $0x78] sm:$0xff] %v973
        %1135 = vst [vmem:[%s257 + $0x80] sm:$0xff] %v977
        %1136 = vst [vmem:[%s257 + $0x88] sm:$0xff] %v979
        %1137 = vst [vmem:[%s257 + $0x90] sm:$0xff] %v983
        %1138 = vst [vmem:[%s257 + $0x98] sm:$0xff] %v985
        %1139 = vst [vmem:[%s257 + $0xa0] sm:$0xff] %v989
        %1140 = vst [vmem:[%s257 + $0xa8] sm:$0xff] %v991
        %1141 = vst [vmem:[%s257 + $0xb0] sm:$0xff] %v995
        %1142 = vst [vmem:[%s257 + $0xb8] sm:$0xff] %v997
        %1143 = vst [vmem:[%s257 + $0xc0] sm:$0xff] %v1001
        %1144 = vst [vmem:[%s257 + $0xc8] sm:$0xff] %v1003
        %1145 = vst [vmem:[%s257 + $0xd0] sm:$0xff] %v1007
        %1146 = vst [vmem:[%s257 + $0xd8] sm:$0xff] %v1009
        %1147 = vst [vmem:[%s257 + $0xe0] sm:$0xff] %v1013
        %1148 = vst [vmem:[%s257 + $0xe8] sm:$0xff] %v1015
        %1149 = vst [vmem:[%s257 + $0xf0] sm:$0xff] %v1019
        %1150 = vst [vmem:[%s257 + $0xf8] sm:$0xff] %v1021
        %1151 = vst [vmem:[%s257 + $0x100] sm:$0xff] %v1025
        %1152 = vst [vmem:[%s257 + $0x108] sm:$0xff] %v1027
        %1153 = vst [vmem:[%s257 + $0x110] sm:$0xff] %v1031
        %1154 = vst [vmem:[%s257 + $0x118] sm:$0xff] %v1033
        %1155 = vst [vmem:[%s257 + $0x120] sm:$0xff] %v1037
        %1156 = vst [vmem:[%s257 + $0x128] sm:$0xff] %v1039
        %1157 = vst [vmem:[%s257 + $0x130] sm:$0xff] %v1043
        %1158 = vst [vmem:[%s257 + $0x138] sm:$0xff] %v1045
        %1159 = vst [vmem:[%s257 + $0x140] sm:$0xff] %v1049
        %1160 = vst [vmem:[%s257 + $0x148] sm:$0xff] %v1051
        %1161 = vst [vmem:[%s257 + $0x150] sm:$0xff] %v1055
        %1162 = vst [vmem:[%s257 + $0x158] sm:$0xff] %v1057
        %1163 = vst [vmem:[%s257 + $0x160] sm:$0xff] %v1061
        %1164 = vst [vmem:[%s257 + $0x168] sm:$0xff] %v1063
        %1165 = vst [vmem:[%s257 + $0x170] sm:$0xff] %v1067
        %1166 = vst [vmem:[%s257 + $0x178] sm:$0xff] %v1069
        %1167 = vst [vmem:[%s257 + $0x180] sm:$0xff] %v1073
        %1168 = vst [vmem:[%s257 + $0x188] sm:$0xff] %v1075
        %1169 = vst [vmem:[%s257 + $0x190] sm:$0xff] %v1079
        %1170 = vst [vmem:[%s257 + $0x198] sm:$0xff] %v1081
        %1171 = vst [vmem:[%s257 + $0x1a0] sm:$0xff] %v1085
        %1172 = vst [vmem:[%s257 + $0x1a8] sm:$0xff] %v1087
        %1173 = vst [vmem:[%s257 + $0x1b0] sm:$0xff] %v1091
        %1174 = vst [vmem:[%s257 + $0x1b8] sm:$0xff] %v1093
        %1175 = vst [vmem:[%s257 + $0x1c0] sm:$0xff] %v1097
        %1176 = vst [vmem:[%s257 + $0x1c8] sm:$0xff] %v1099
        %1177 = vst [vmem:[%s257 + $0x1d0] sm:$0xff] %v1103
        %1178 = vst [vmem:[%s257 + $0x1d8] sm:$0xff] %v1105
        %1179 = vst [vmem:[%s257 + $0x1e0] sm:$0xff] %v1109
        %1180 = vst [vmem:[%s257 + $0x1e8] sm:$0xff] %v1111
        %1181 = vst [vmem:[%s257 + $0x1f0] sm:$0xff] %v1115
        %1182 = vst [vmem:[%s257 + $0x1f8] sm:$0xff] %v1117
        %s1183 = sand.u32 %s141, 1
        %s1184 = scalar_lea.sflag [#allocation4], %s1183
        %s1185 = sand.u32 %s141, 1
        %s1186 = smul.addr %s1185, 512
        %s1187 = scalar_lea.vmem [#allocation7], %s1186
        // Predicated region
        $region49: #{tpu_custom_call.1} parent=39 // pred_check
          %p1188 = pneg %p151
        $region50: #{tpu_custom_call.1} parent=39 // pred_check_branch
          %1190 = sbr.rel (%p1188) target = $region52
        $region51: #{tpu_custom_call.1} parent=39 // pred_region
          %s1191 = smul.u32 32, %s23
          %s1193 = ssub.s32 8192, 8192
          %1194 = vsyncadd %s1184, %s1193
          %s1195 = smul.addr %s1191, 2
          %s1196 = smul.addr %s1195, 128
          %s1197 = scalar_lea.hbm %s5, %s1196
          %s1198 = sshll.u32 %s1187, 4
          %s1199 = int_to_ptr.vmem [resolvable:$true] %s1198
          %1204 = dma.vmem_to_hbm [thread:$0]  %s1199, 8192, %s1197, %s1184, 256, 256, 16
        $region52: #{tpu_custom_call.1} parent=39 // pred_fallthru
          _
      $region40: #{tpu_custom_call.1} parent=5 // pred_fallthru
        _
      %p1205 = scmp.le.s32.totalorder 2, %s18
      // Predicated region
      $region53: #{tpu_custom_call.1} parent=5 // pred_check
        %p1206 = pneg %p1205
      $region54: #{tpu_custom_call.1} parent=5 // pred_check_branch
        %1208 = sbr.rel (%p1206) target = $region56
      $region55: #{tpu_custom_call.1} parent=5 // pred_region
        %s1209 = ssub.s32 %s18, 2
        // Predicated region
        $region57: #{tpu_custom_call.1} parent=55 // pred_check
          %p1210 = pneg %p157
        $region58: #{tpu_custom_call.1} parent=55 // pred_check_branch
          %1212 = sbr.rel (%p1210) target = $region60
        $region59: #{tpu_custom_call.1} parent=55 // pred_region
          %s1213 = sand.u32 %s142, 1
          %s1214 = scalar_lea.sflag [#allocation4], %s1213
          %s1215 = sand.u32 %s142, 1
          %s1216 = smul.addr %s1215, 512
          %s1217 = scalar_lea.vmem [#allocation7], %s1216
          %1218 = dma.done %s1214, 8192
        $region60: #{tpu_custom_call.1} parent=55 // pred_fallthru
          _
      $region56: #{tpu_custom_call.1} parent=5 // pred_fallthru
        _
    $region6: #{tpu_custom_call.1} parent=1 // loop_footer
      %s22 = sadd.s32 1, %s18
    $region7: #{tpu_custom_call.1} parent=1 // loop_footer_branch
      %17 = sbr.rel target = $region3
    $region8: #{tpu_custom_call.1} parent=1 // loop_exit
      _
    %1219 = vsyncpa [#allocation3], 1
    %s1220 = scalar_lea.sflag [#allocation3], 1
    %1221 = vsyncpa %s1220, 1
    %1222 = vsyncpa [#allocation6], 1
    %1223 = vsyncpa [#allocation4], 1
    %s1224 = scalar_lea.sflag [#allocation4], 1
    %1225 = vsyncpa %s1224, 1

</llo_original>
